<compile_context>
chip_gen: v6e
topology: v6e:2x2x1
jax: 0.10.0
libtpu: 0.0.40
codegen_flags: <defaults>
</compile_context>

<pallas_src>
import functools

import numpy as np
import jax
import jax.numpy as jnp
from jax.experimental import pallas as pl
from jax.experimental.pallas import tpu as pltpu


def _round_up(a, b):
    return ((a + b - 1) // b) * b


def _pcup_kernel(a_ref, w_ref, p_ref, h_ref, f_ref, *, cpad, negative_slope):
    """One (phase, lane-tile) block.

    a_ref : (1, Rmax, TL)      bf16  polyphase im2col rows (x rows, then mask rows)
    w_ref : (1, cpad+1, Rmax)  bf16  this phase's flipped taps + mask-indicator row
    p_ref : (cpad, 3)          f32   per-channel [bias, bn_scale, bn_shift]
    h_ref : (1, cpad, TL)      f32   activated, batch-normed partial-conv output
    f_ref : (1, 1, TL)         f32   per-pixel valid flag (1-channel new_mask)
    """
    # Single MXU matmul: conv output (rows 0..cpad-1) and mask-sum (row cpad) together.
    acc = jnp.dot(w_ref[0], a_ref[0], preferred_element_type=jnp.float32)  # (cpad+1, TL)
    conv = acc[:cpad, :]                 # tile-aligned slice (cpad % 8 == 0)
    msum = acc[cpad:cpad + 1, :]         # (1, TL), exact small integers

    holes = msum == 0.0
    inv = pl.reciprocal(jnp.where(holes, 1.0, msum), approx=False)

    bias = p_ref[:, 0:1]
    scale = p_ref[:, 1:2]
    shift = p_ref[:, 2:3]

    h = conv * inv + bias                # partial-conv renormalization
    h = jnp.where(holes, 0.0, h)         # hole zeroing (before BN, like torch)
    h = h * scale + shift                # fused inference BatchNorm
    if negative_slope is not None:
        if negative_slope == 0.0:
            h = jnp.maximum(h, 0.0)                           # ReLU
        else:
            h = jnp.where(h > 0.0, h, negative_slope * h)     # LeakyReLU

    h_ref[0] = h.astype(h_ref.dtype)
    f_ref[0] = jnp.where(holes, 0.0, 1.0).astype(f_ref.dtype)


def pcup_forward(x, mask, weight, bias, gamma, beta, running_mean, running_var,
                 *, stride, padding, output_padding=0, eps=1e-5, activ="relu"):
    """PCUp forward: PartialConvTranspose -> BatchNorm(inference) -> activation.

    x, mask : (N, Cin, H, W) NCHW float
    weight  : (Cin, Cout, K, K)  PyTorch ConvTranspose2d weight layout (groups=1)
    bias    : (Cout,) or None
    gamma, beta, running_mean, running_var : (Cout,) or None (identity BN if None)
    Returns (h, new_mask), both (N, Cout, OH, OW).
    """
    N, Cin, H, W = x.shape
    Cout, K = weight.shape[1], weight.shape[2]
    s = stride
    OH = (H - 1) * s - 2 * padding + K + output_padding
    OW = (W - 1) * s - 2 * padding + K + output_padding

    pad_lo = K - 1 - padding
    assert pad_lo >= 0, "padding must be <= kernel_size - 1"

    # Padded output grid so every polyphase has the same (OHp, OWp) extent.
    OH_pad, OW_pad = _round_up(OH, s), _round_up(OW, s)
    OHp, OWp = OH_pad // s, OW_pad // s
    Lp = OHp * OWp
    T = -(-K // s)                       # max taps per spatial dim per phase
    T2 = T * T
    Rmax = T2 * Cin + T2                 # x rows + channel-summed mask rows
    ss = s * s
    Cout_pad = _round_up(Cout, 8)        # conv rows on whole sublane tiles
    Crows = Cout_pad + 1                 # + mask-sum row on its own tile

    # Lane tiling: TL multiple of 128 dividing the padded per-phase lane extent; the
    # batch is folded into the lane axis so batch boundaries land on tile boundaries.
    TL = min(2048, _round_up(Lp, 128))
    Lp_pad = _round_up(Lp, TL)
    NL = N * Lp_pad

    x = x.astype(jnp.float32)
    mask = mask.astype(jnp.float32)
    xm = x * mask
    # Channel-summed mask: exact equivalent input to the all-ones mask_conv.
    mc = jnp.sum(mask, axis=1, keepdims=True)                  # (N, 1, H, W)

    # Static polyphase tap table: output phase ph uses kernel taps kh with
    # (ph + kh - pad_lo) % s == 0, reading input row base + q, base = (ph+kh-pad_lo)//s.
    def taps(phase):
        return [(kh, (phase + kh - pad_lo) // s)
                for kh in range(K) if (phase + kh - pad_lo) % s == 0]

    all_bases = [b for ph in range(s) for (_, b) in taps(ph)]
    pad_t = max(0, -min(all_bases))
    pad_b = max(0, max(all_bases) + OHp - H)
    pad_l = max(0, -min(all_bases))
    pad_r = max(0, max(all_bases) + OWp - W)
    x_h = jnp.pad(xm, ((0, 0), (0, 0), (pad_t, pad_b), (pad_l, pad_r)))
    m_h = jnp.pad(mc, ((0, 0), (0, 0), (pad_t, pad_b), (pad_l, pad_r)))

    w_f32 = weight.astype(jnp.float32)

    a_phases, w_phases = [], []
    for ph in range(s):
        th_list = taps(ph)
        for pw in range(s):
            tw_list = taps(pw)
            x_blocks, m_blocks, w_blocks, m_ind = [], [], [], []
            for th in range(T):
                for tw in range(T):
                    if th < len(th_list) and tw < len(tw_list):
                        kh, bh = th_list[th]
                        kw, bw = tw_list[tw]
                        x_blocks.append(x_h[:, :, bh + pad_t:bh + pad_t + OHp,
                                                  bw + pad_l:bw + pad_l + OWp])
                        m_blocks.append(m_h[:, :, bh + pad_t:bh + pad_t + OHp,
                                                  bw + pad_l:bw + pad_l + OWp])
                        # flipped-kernel tap, (Cout, Cin)
                        w_blocks.append(jnp.transpose(w_f32[:, :, K - 1 - kh, K - 1 - kw]))
                        m_ind.append(1.0)
                    else:                                        # padded tap slot
                        x_blocks.append(jnp.zeros((N, Cin, OHp, OWp), jnp.float32))
                        m_blocks.append(jnp.zeros((N, 1, OHp, OWp), jnp.float32))
                        w_blocks.append(jnp.zeros((Cout, Cin), jnp.float32))
                        m_ind.append(0.0)

            # A rows: (tap, cin) x-rows then (tap) mask rows; lanes: (n, q).
            xs = jnp.stack(x_blocks, 0).transpose(0, 2, 1, 3, 4).reshape(T2 * Cin, N, Lp)
            ms = jnp.stack(m_blocks, 0).transpose(0, 2, 1, 3, 4).reshape(T2, N, Lp)
            a_ph = jnp.concatenate([xs, ms], axis=0)                      # (Rmax, N, Lp)
            a_ph = jnp.pad(a_ph, ((0, 0), (0, 0), (0, Lp_pad - Lp)))
            a_phases.append(a_ph.reshape(Rmax, NL))

            w_conv = jnp.concatenate(w_blocks, axis=1)                    # (Cout, T2*Cin)
            w_conv = jnp.concatenate(
                [w_conv, jnp.zeros((Cout, T2), jnp.float32)], axis=1)     # mask cols = 0
            w_conv = jnp.pad(w_conv, ((0, Cout_pad - Cout), (0, 0)))
            w_mask = jnp.concatenate(
                [jnp.zeros((1, T2 * Cin), jnp.float32),
                 jnp.asarray(m_ind, jnp.float32)[None, :]], axis=1)       # (1, Rmax)
            w_phases.append(jnp.concatenate([w_conv, w_mask], axis=0))    # (Crows, Rmax)

    A = jnp.stack(a_phases, 0).astype(jnp.bfloat16)       # (ss, Rmax, NL)
    Wm = jnp.stack(w_phases, 0).astype(jnp.bfloat16)      # (ss, Crows, Rmax)

    # Per-channel epilogue params: [bias, bn_scale, bn_shift], padded to Cout_pad.
    b = jnp.zeros((Cout,), jnp.float32) if bias is None else bias.astype(jnp.float32)
    if gamma is None:
        scale = jnp.ones((Cout,), jnp.float32)
        shift = jnp.zeros((Cout,), jnp.float32)
    else:
        scale = gamma.astype(jnp.float32) / jnp.sqrt(running_var.astype(jnp.float32) + eps)
        shift = beta.astype(jnp.float32) - running_mean.astype(jnp.float32) * scale
    params = jnp.pad(jnp.stack([b, scale, shift], axis=1),
                     ((0, Cout_pad - Cout), (0, 0)))               # (Cout_pad, 3)

    if activ == "relu":
        neg_slope = 0.0
    elif activ == "leaky":
        neg_slope = 0.2
    else:
        neg_slope = None

    # Explicit VMEM budget for the double-buffered tiles (review: v7x has 64 MiB).
    tile_bytes = (2 * Rmax * TL * 2          # A (bf16), 2 buffers
                  + 2 * Crows * Rmax * 2     # W (bf16)
                  + 2 * Cout_pad * 3 * 4     # params
                  + 2 * Cout_pad * TL * 4    # h out (f32)
                  + 2 * TL * 4)              # flag out (f32)
    vmem_limit = int(min(max(3 * tile_bytes, 16 * 1024 * 1024), 64 * 1024 * 1024))

    kernel = functools.partial(_pcup_kernel, cpad=Cout_pad, negative_slope=neg_slope)

    h_flat, f_flat = pl.pallas_call(
        kernel,
        out_shape=(jax.ShapeDtypeStruct((ss, Cout_pad, NL), jnp.float32),
                   jax.ShapeDtypeStruct((ss, 1, NL), jnp.float32)),
        grid_spec=pltpu.PrefetchScalarGridSpec(
            num_scalar_prefetch=0,
            grid=(ss, NL // TL),
            in_specs=[
                pl.BlockSpec((1, Rmax, TL), lambda p, l: (p, 0, l)),
                pl.BlockSpec((1, Crows, Rmax), lambda p, l: (p, 0, 0)),
                pl.BlockSpec((Cout_pad, 3), lambda p, l: (0, 0)),
            ],
            out_specs=(
                pl.BlockSpec((1, Cout_pad, TL), lambda p, l: (p, 0, l)),
                pl.BlockSpec((1, 1, TL), lambda p, l: (p, 0, l)),
            ),
        ),
        compiler_params=pltpu.CompilerParams(
            dimension_semantics=("parallel", "parallel"),
            vmem_limit_bytes=vmem_limit),
    )(A, Wm, params)

    # Interleave phases back: out[n, c, qh*s+ph, qw*s+pw] = phase(ph,pw)[c, n, qh, qw].
    h = h_flat.reshape(s, s, Cout_pad, N, Lp_pad)[..., :Lp]
    h = h.reshape(s, s, Cout_pad, N, OHp, OWp).transpose(3, 2, 4, 0, 5, 1)
    h = h.reshape(N, Cout_pad, OH_pad, OW_pad)[:, :Cout, :OH, :OW]

    f = f_flat.reshape(s, s, 1, N, Lp_pad)[..., :Lp]
    f = f.reshape(s, s, 1, N, OHp, OWp).transpose(3, 2, 4, 0, 5, 1)
    f = f.reshape(N, 1, OH_pad, OW_pad)[:, :, :OH, :OW]
    # Module semantics: new_mask has Cout channels.  Consumers that accept a 1-channel
    # flag should take `f` directly to avoid the Cout-x writeback.
    new_mask = jnp.broadcast_to(f, (N, Cout, OH, OW))
    return h, new_mask


def _bf16_round(a):
    return np.asarray(jnp.asarray(a, jnp.float32).astype(jnp.bfloat16).astype(jnp.float32))


def _reference_pcup(x, mask, weight, bias, gamma, beta, running_mean, running_var,
                    *, stride, padding, output_padding, eps, activ):
    """Direct scatter-add PCUp reference (NCHW), mirroring the torch forward.

    Inputs to the matmul are rounded to bf16 (same mixed precision as the kernel);
    everything else is computed in high precision.
    """
    x = np.asarray(x, np.float32)
    mask = np.asarray(mask, np.float32)
    weight = np.asarray(weight, np.float32)
    N, Cin, H, W = x.shape
    Cout, K = weight.shape[1], weight.shape[2]
    OH = (H - 1) * stride - 2 * padding + K + output_padding
    OW = (W - 1) * stride - 2 * padding + K + output_padding

    xm = _bf16_round(x * mask)
    w = _bf16_round(weight)

    conv = np.zeros((N, Cout, OH, OW), np.float64)
    msum = np.zeros((N, 1, OH, OW), np.float64)
    for n in range(N):
        for ih in range(H):
            for iw in range(W):
                for kh in range(K):
                    for kw in range(K):
                        oh = ih * stride - padding + kh
                        ow = iw * stride - padding + kw
                        if 0 <= oh < OH and 0 <= ow < OW:
                            conv[n, :, oh, ow] += xm[n, :, ih, iw] @ w[:, :, kh, kw]
                            msum[n, 0, oh, ow] += mask[n, :, ih, iw].sum()

    holes = msum == 0.0
    denom = np.where(holes, 1.0, msum)
    b = np.zeros((Cout,), np.float32) if bias is None else np.asarray(bias, np.float32)
    out = conv / denom + b[None, :, None, None]
    out = np.where(holes, 0.0, out)

    if gamma is None:
        scale = np.ones((Cout,), np.float32)
        shift = np.zeros((Cout,), np.float32)
    else:
        gamma = np.asarray(gamma, np.float32)
        beta = np.asarray(beta, np.float32)
        mean = np.asarray(running_mean, np.float32)
        var = np.asarray(running_var, np.float32)
        scale = gamma / np.sqrt(var + eps)
        shift = beta - mean * scale
    out = out * scale[None, :, None, None] + shift[None, :, None, None]

    if activ == "relu":
        out = np.maximum(out, 0.0)
    elif activ == "leaky":
        out = np.where(out > 0.0, out, 0.2 * out)

    new_mask = np.broadcast_to(np.where(holes, 0.0, 1.0),
                               (N, Cout, OH, OW)).astype(np.float32)
    return out.astype(np.float32), new_mask


if __name__ == "__main__":
    # PCUp(in_ch=4, out_ch=8, k=3, s=2, p=1, bn=True, activ='relu', conv_bias=False)
    N, Cin, Cout, H, W = 2, 4, 8, 16, 16
    K, stride, padding, output_padding = 3, 2, 1, 0
    eps = 1e-5
    activ = "relu"

    key = jax.random.PRNGKey(0)
    k1, k2, k3, k4, k5, k6, k7 = jax.random.split(key, 7)

    x = jax.random.normal(k1, (N, Cin, H, W), jnp.float32)
    mask = (jax.random.uniform(k2, (N, 1, H, W)) > 0.5).astype(jnp.float32)
    mask = jnp.broadcast_to(mask, (N, Cin, H, W))

    # Kaiming-style conv-transpose weight; conv_bias=False (PCUp default) -> bias None.
    fan_in = Cin * K * K
    weight = jax.random.normal(k3, (Cin, Cout, K, K), jnp.float32) * np.sqrt(2.0 / fan_in)
    bias = None

    # Inference-mode BatchNorm parameters.
    gamma = 1.0 + 0.1 * jax.random.normal(k4, (Cout,), jnp.float32)
    beta = 0.1 * jax.random.normal(k5, (Cout,), jnp.float32)
    running_mean = 0.1 * jax.random.normal(k6, (Cout,), jnp.float32)
    running_var = jax.random.uniform(k7, (Cout,), jnp.float32, 0.5, 1.5)

    out, new_mask = pcup_forward(
        x, mask, weight, bias, gamma, beta, running_mean, running_var,
        stride=stride, padding=padding, output_padding=output_padding,
        eps=eps, activ=activ)
    out = jax.block_until_ready(out)
    new_mask = jax.block_until_ready(new_mask)

    ref_out, ref_mask = _reference_pcup(
        np.asarray(x), np.asarray(mask), np.asarray(weight), None,
        np.asarray(gamma), np.asarray(beta),
        np.asarray(running_mean), np.asarray(running_var),
        stride=stride, padding=padding, output_padding=output_padding,
        eps=eps, activ=activ)

    np.testing.assert_allclose(np.asarray(out), ref_out, rtol=1e-4, atol=1e-4)
    np.testing.assert_allclose(np.asarray(new_mask), ref_mask, rtol=0, atol=0)
    print("KERNEL_OK")
</pallas_src>

<mosaic_0001>
module attributes {stable_mosaic.version = 11 : i64} {
  func.func @_pcup_kernel(%arg0: i32, %arg1: i32, %arg2: memref<1x20x256xbf16, #tpu.memory_space<vmem>>, %arg3: memref<1x9x20xbf16, #tpu.memory_space<vmem>>, %arg4: memref<8x3xf32, #tpu.memory_space<vmem>>, %arg5: memref<1x8x256xf32, #tpu.memory_space<vmem>>, %arg6: memref<1x1x256xf32, #tpu.memory_space<vmem>>) attributes {dimension_semantics = [#tpu.dimension_semantics<parallel>, #tpu.dimension_semantics<parallel>], iteration_bounds = array<i64: 4, 2>, scalar_prefetch = 0 : i64, scratch_operands = 0 : i64, tpu.core_type = #tpu.core_type<tc>, window_params = [{transform_indices = @transform_0, window_bounds = array<i64: 1, 20, 256>}, {transform_indices = @transform_1, window_bounds = array<i64: 1, 9, 20>}, {pipeline_mode = #tpu.pipeline_mode<synchronous>, transform_indices = @transform_2, window_bounds = array<i64: 8, 3>}, {transform_indices = @transform_3, window_bounds = array<i64: 1, 8, 256>}, {transform_indices = @transform_4, window_bounds = array<i64: 1, 1, 256>}]} {
    %c0 = arith.constant 0 : index
    %c0_0 = arith.constant 0 : index
    %c0_1 = arith.constant 0 : index
    %0 = vector.load %arg3[%c0, %c0_0, %c0_1] : memref<1x9x20xbf16, #tpu.memory_space<vmem>>, vector<1x9x20xbf16>
    %1 = vector.shape_cast %0 : vector<1x9x20xbf16> to vector<9x20xbf16>
    %c0_2 = arith.constant 0 : index
    %c0_3 = arith.constant 0 : index
    %c0_4 = arith.constant 0 : index
    %2 = vector.load %arg2[%c0_2, %c0_3, %c0_4] : memref<1x20x256xbf16, #tpu.memory_space<vmem>>, vector<1x20x256xbf16>
    %3 = vector.shape_cast %2 : vector<1x20x256xbf16> to vector<20x256xbf16>
    %cst = arith.constant dense<0.000000e+00> : vector<9x256xf32>
    %4 = tpu.matmul %1, %3, %cst {dimension_numbers = #tpu.dot_dimension_numbers<[1], [0], [0], [1], [0, 0, 1, 1], [], []>} : vector<9x20xbf16>, vector<20x256xbf16>, vector<9x256xf32> -> vector<9x256xf32>
    %5 = vector.extract_strided_slice %4 {offsets = [0, 0], sizes = [8, 256], strides = [1, 1]} : vector<9x256xf32> to vector<8x256xf32>
    %6 = vector.extract_strided_slice %4 {offsets = [8, 0], sizes = [1, 256], strides = [1, 1]} : vector<9x256xf32> to vector<1x256xf32>
    %cst_5 = arith.constant 0.000000e+00 : f32
    %7 = vector.broadcast %cst_5 : f32 to vector<1x256xf32>
    %8 = arith.cmpf oeq, %6, %7 : vector<1x256xf32>
    %cst_6 = arith.constant 1.000000e+00 : f32
    %9 = vector.broadcast %cst_6 : f32 to vector<1x256xf32>
    %10 = arith.select %8, %9, %6 : vector<1x256xi1>, vector<1x256xf32>
    %11 = tpu.reciprocal %10 : vector<1x256xf32> -> vector<1x256xf32>
    %c0_7 = arith.constant 0 : index
    %c0_8 = arith.constant 0 : index
    %12 = vector.load %arg4[%c0_7, %c0_8] : memref<8x3xf32, #tpu.memory_space<vmem>>, vector<8x1xf32>
    %c0_9 = arith.constant 0 : index
    %c1 = arith.constant 1 : index
    %13 = vector.load %arg4[%c0_9, %c1] : memref<8x3xf32, #tpu.memory_space<vmem>>, vector<8x1xf32>
    %c0_10 = arith.constant 0 : index
    %c2 = arith.constant 2 : index
    %14 = vector.load %arg4[%c0_10, %c2] : memref<8x3xf32, #tpu.memory_space<vmem>>, vector<8x1xf32>
    %15 = vector.broadcast %11 : vector<1x256xf32> to vector<8x256xf32>
    %16 = arith.mulf %5, %15 : vector<8x256xf32>
    %17 = vector.broadcast %12 : vector<8x1xf32> to vector<8x256xf32>
    %18 = arith.addf %16, %17 : vector<8x256xf32>
    %cst_11 = arith.constant 0.000000e+00 : f32
    %19 = vector.shape_cast %8 : vector<1x256xi1> to vector<1x256xi1>
    %20 = vector.broadcast %19 : vector<1x256xi1> to vector<8x256xi1>
    %21 = vector.broadcast %cst_11 : f32 to vector<8x256xf32>
    %22 = arith.select %20, %21, %18 : vector<8x256xi1>, vector<8x256xf32>
    %23 = vector.broadcast %13 : vector<8x1xf32> to vector<8x256xf32>
    %24 = arith.mulf %22, %23 : vector<8x256xf32>
    %25 = vector.broadcast %14 : vector<8x1xf32> to vector<8x256xf32>
    %26 = arith.addf %24, %25 : vector<8x256xf32>
    %cst_12 = arith.constant 0.000000e+00 : f32
    %27 = vector.broadcast %cst_12 : f32 to vector<8x256xf32>
    %28 = arith.maximumf %26, %27 : vector<8x256xf32>
    %c0_13 = arith.constant 0 : index
    %c0_14 = arith.constant 0 : index
    %c0_15 = arith.constant 0 : index
    %29 = vector.load %arg5[%c0_13, %c0_14, %c0_15] : memref<1x8x256xf32, #tpu.memory_space<vmem>>, vector<1x8x256xf32>
    %30 = vector.shape_cast %29 : vector<1x8x256xf32> to vector<8x256xf32>
    %31 = vector.shape_cast %28 : vector<8x256xf32> to vector<1x8x256xf32>
    tpu.vector_store %arg5[%c0_13, %c0_14, %c0_15], %31 {strides = array<i32>} : memref<1x8x256xf32, #tpu.memory_space<vmem>>, vector<1x8x256xf32>,
    %cst_16 = arith.constant 0.000000e+00 : f32
    %cst_17 = arith.constant 1.000000e+00 : f32
    %32 = vector.broadcast %cst_16 : f32 to vector<1x256xf32>
    %33 = vector.broadcast %cst_17 : f32 to vector<1x256xf32>
    %34 = arith.select %8, %32, %33 : vector<1x256xi1>, vector<1x256xf32>
    %c0_18 = arith.constant 0 : index
    %c0_19 = arith.constant 0 : index
    %c0_20 = arith.constant 0 : index
    %35 = vector.load %arg6[%c0_18, %c0_19, %c0_20] : memref<1x1x256xf32, #tpu.memory_space<vmem>>, vector<1x1x256xf32>
    %36 = vector.shape_cast %35 : vector<1x1x256xf32> to vector<1x256xf32>
    %37 = vector.shape_cast %34 : vector<1x256xf32> to vector<1x1x256xf32>
    tpu.vector_store %arg6[%c0_18, %c0_19, %c0_20], %37 {strides = array<i32>} : memref<1x1x256xf32, #tpu.memory_space<vmem>>, vector<1x1x256xf32>,
    return
  }
  func.func @transform_0(%arg0: i32, %arg1: i32) -> (i32, i32, i32) {
    %c0_i32 = arith.constant 0 : i32
    %c0_i32_0 = arith.constant 0 : i32
    return %arg0, %c0_i32, %arg1 : i32, i32, i32
  }
  func.func @transform_1(%arg0: i32, %arg1: i32) -> (i32, i32, i32) {
    %c0_i32 = arith.constant 0 : i32
    %c0_i32_0 = arith.constant 0 : i32
    %c0_i32_1 = arith.constant 0 : i32
    return %arg0, %c0_i32, %c0_i32_0 : i32, i32, i32
  }
  func.func @transform_2(%arg0: i32, %arg1: i32) -> (i32, i32) {
    %c0_i32 = arith.constant 0 : i32
    %c0_i32_0 = arith.constant 0 : i32
    %c0_i32_1 = arith.constant 0 : i32
    return %c0_i32, %c0_i32_0 : i32, i32
  }
  func.func @transform_3(%arg0: i32, %arg1: i32) -> (i32, i32, i32) {
    %c0_i32 = arith.constant 0 : i32
    %c0_i32_0 = arith.constant 0 : i32
    return %arg0, %c0_i32, %arg1 : i32, i32, i32
  }
  func.func @transform_4(%arg0: i32, %arg1: i32) -> (i32, i32, i32) {
    %c0_i32 = arith.constant 0 : i32
    %c0_i32_0 = arith.constant 0 : i32
    return %arg0, %c0_i32, %arg1 : i32, i32, i32
  }
}

</mosaic_0001>

<llo_original>
// kernel: tpu_custom_call.1
$region0: #{tpu_custom_call.1}
  #allocation0 [shape = 'u32[]', space=smem, size = 0x4, offset = 0x4, fixed_abs, tag = 'smem constant byte address 0x4 - core index']
  #allocation1 [shape = 'u32[144,128]{1,0:T(1,128)}', space=vmem, size = 0x12000, scoped, tag = 'internal scratch']
  %s0 = inlined_call_operand.vmem [shape: bf16[4,20,512], index: 0, kind: input, shape index: {}]
  %s1 = inlined_call_operand.vmem [shape: bf16[4,9,20], index: 1, kind: input, shape index: {}]
  %s2 = inlined_call_operand.vmem [shape: f32[8,3], index: 2, kind: input, shape index: {}]
  %s3 = inlined_call_operand.hbm [shape: f32[4,8,512], index: 3, kind: output, shape index: {0}]
  %s4 = inlined_call_operand.hbm [shape: f32[4,1,512], index: 4, kind: output, shape index: {1}]
  %5 = xla_tuple %s3, %s4
  %s6 = sld [smem:[#allocation0]]
  $region91: #{tpu_custom_call.1} parent=0
    _
  %s8 = ssub.s32 1, %s6
  %s9 = scalar_select 0, %s8, %s6
  $region1: #{tpu_custom_call.1} parent=0
    #allocation2 [shape = 'u8[24576]{0}', space=vmem, size = 0x6000, scoped, tag = 'input window, operand 0']
    #allocation3 [shape = 'u8[16384]{0}', space=vmem, size = 0x4000, scoped, tag = 'output window, operand 0']
    #allocation4 [shape = 's32[2]{0}', space=sflag, size = 0x8, scoped, tag = 'scoped memory for tpu_custom_call.1']
    #allocation5 [shape = 'u8[2048]{0}', space=vmem, size = 0x800, scoped, tag = 'output window, operand 1']
    #allocation6 [shape = 's32[2]{0}', space=sflag, size = 0x8, scoped, tag = 'scoped memory for tpu_custom_call.1']
    %10 = vsyncpa [#allocation4], 0
    %s11 = scalar_lea.sflag [#allocation4], 1
    %12 = vsyncpa %s11, 0
    %13 = vsyncpa [#allocation6], 0
    %s14 = scalar_lea.sflag [#allocation6], 1
    %15 = vsyncpa %s14, 0
    loop: start=0, step=1, limit=10
    $region2: #{tpu_custom_call.1} parent=1 // loop_pre_header
      _
    $region3: #{tpu_custom_call.1} parent=1 // loop_header
      %s17 = sphi 0, %s21
      %p18 = scmp.ge.s32.totalorder %s17, 10
      %s24 = sphi 0, %s36
      %s25 = sphi 0, %s32
      %s26 = sphi 0, %s24
      %s27 = sphi 0, %s25
      %s28 = sphi 0, %s26
      %s29 = sphi 0, %s27
      %s41 = sphi 0, %s43
      %s44 = sphi 0, %s41
      %s45 = sphi 0, %s44
      %s61 = sphi 0, %s45
      %s67 = sphi 0, %s69
      %s70 = sphi 0, %s67
      %s71 = sphi 0, %s70
      %s87 = sphi 0, %s71
      %s91 = sphi 0, %s91
      %s93 = sphi 0, %s91
      %s94 = sphi 0, %s93
      %s108 = sphi 0, %s94
      %s116 = sphi 0, %s118
      %s119 = sphi 0, %s116
      %s120 = sphi 0, %s119
      %s136 = sphi 0, %s120
      %s144 = sphi 0, %s146
      %s147 = sphi 0, %s144
      %s148 = sphi 0, %s147
      %s164 = sphi 0, %s148
    $region4: #{tpu_custom_call.1} parent=1 // loop_header_branch
      %20 = sbr.rel (%p18) target = $region8
    $region5: #{tpu_custom_call.1} parent=1 // loop_body
      %s22 = ssub.s32 %s17, 1
      %s23 = ssub.s32 %s17, 2
      %s30 = sadd.s32 1, %s25
      %p31 = scmp.ge.s32.totalorder %s30, 2
      %s32 = scalar_select %p31, 0, %s30
      %s33 = sadd.s32 1, %s24
      %s34 = scalar_select %p31, %s33, %s24
      %p35 = scmp.ge.s32.totalorder %s34, 4
      %s36 = scalar_select %p35, 0, %s34
      %s37 = ssub.s32 %s24, %s36
      %s38 = ssub.s32 %s25, %s32
      %s39 = sor.u32 %s37, %s38
      %p40 = scmp.eq.s32.totalorder %s39, 0
      %s42 = sadd.s32 %s41, 1
      %s43 = scalar_select %p40, %s41, %s42
      %p46 = pneg %p40
      %p47 = scmp.eq.s32.totalorder %s17, 7
      %p48 = por %p46, %p47
      %p49 = scmp.ne.s32.totalorder %s41, %s44
      %p50 = scmp.eq.s32.totalorder %s17, 0
      %p51 = por %p49, %p50
      %p52 = scmp.ne.s32.totalorder %s41, %s44
      %p53 = scmp.eq.s32.totalorder %s22, 7
      %p54 = por %p52, %p53
      %p55 = scmp.ne.s32.totalorder %s44, %s45
      %p56 = scmp.eq.s32.totalorder %s22, 0
      %p57 = por %p55, %p56
      %p58 = scmp.ne.s32.totalorder %s44, %s45
      %p59 = scmp.eq.s32.totalorder %s23, 7
      %p60 = por %p58, %p59
      %p62 = scmp.ne.s32.totalorder %s45, %s61
      %p63 = scmp.eq.s32.totalorder %s23, 0
      %p64 = por %p62, %p63
      %s65 = ssub.s32 %s24, %s36
      %p66 = scmp.eq.s32.totalorder %s65, 0
      %s68 = sadd.s32 %s67, 1
      %s69 = scalar_select %p66, %s67, %s68
      %p72 = pneg %p66
      %p73 = scmp.eq.s32.totalorder %s17, 7
      %p74 = por %p72, %p73
      %p75 = scmp.ne.s32.totalorder %s67, %s70
      %p76 = scmp.eq.s32.totalorder %s17, 0
      %p77 = por %p75, %p76
      %p78 = scmp.ne.s32.totalorder %s67, %s70
      %p79 = scmp.eq.s32.totalorder %s22, 7
      %p80 = por %p78, %p79
      %p81 = scmp.ne.s32.totalorder %s70, %s71
      %p82 = scmp.eq.s32.totalorder %s22, 0
      %p83 = por %p81, %p82
      %p84 = scmp.ne.s32.totalorder %s70, %s71
      %p85 = scmp.eq.s32.totalorder %s23, 7
      %p86 = por %p84, %p85
      %p88 = scmp.ne.s32.totalorder %s71, %s87
      %p89 = scmp.eq.s32.totalorder %s23, 0
      %p90 = por %p88, %p89
      %s92 = sadd.s32 %s91, 1
      %p95 = scmp.eq.s32.totalorder %s17, 7
      %p96 = scmp.ne.s32.totalorder %s91, %s93
      %p97 = scmp.eq.s32.totalorder %s17, 0
      %p98 = por %p96, %p97
      %p99 = scmp.ne.s32.totalorder %s91, %s93
      %p100 = scmp.eq.s32.totalorder %s22, 7
      %p101 = por %p99, %p100
      %p102 = scmp.ne.s32.totalorder %s93, %s94
      %p103 = scmp.eq.s32.totalorder %s22, 0
      %p104 = por %p102, %p103
      %p105 = scmp.ne.s32.totalorder %s93, %s94
      %p106 = scmp.eq.s32.totalorder %s23, 7
      %p107 = por %p105, %p106
      %p109 = scmp.ne.s32.totalorder %s94, %s108
      %p110 = scmp.eq.s32.totalorder %s23, 0
      %p111 = por %p109, %p110
      %s112 = ssub.s32 %s24, %s36
      %s113 = ssub.s32 %s25, %s32
      %s114 = sor.u32 %s112, %s113
      %p115 = scmp.eq.s32.totalorder %s114, 0
      %s117 = sadd.s32 %s116, 1
      %s118 = scalar_select %p115, %s116, %s117
      %p121 = pneg %p115
      %p122 = scmp.eq.s32.totalorder %s17, 7
      %p123 = por %p121, %p122
      %p124 = scmp.ne.s32.totalorder %s116, %s119
      %p125 = scmp.eq.s32.totalorder %s17, 0
      %p126 = por %p124, %p125
      %p127 = scmp.ne.s32.totalorder %s116, %s119
      %p128 = scmp.eq.s32.totalorder %s22, 7
      %p129 = por %p127, %p128
      %p130 = scmp.ne.s32.totalorder %s119, %s120
      %p131 = scmp.eq.s32.totalorder %s22, 0
      %p132 = por %p130, %p131
      %p133 = scmp.ne.s32.totalorder %s119, %s120
      %p134 = scmp.eq.s32.totalorder %s23, 7
      %p135 = por %p133, %p134
      %p137 = scmp.ne.s32.totalorder %s120, %s136
      %p138 = scmp.eq.s32.totalorder %s23, 0
      %p139 = por %p137, %p138
      %s140 = ssub.s32 %s24, %s36
      %s141 = ssub.s32 %s25, %s32
      %s142 = sor.u32 %s140, %s141
      %p143 = scmp.eq.s32.totalorder %s142, 0
      %s145 = sadd.s32 %s144, 1
      %s146 = scalar_select %p143, %s144, %s145
      %p149 = pneg %p143
      %p150 = scmp.eq.s32.totalorder %s17, 7
      %p151 = por %p149, %p150
      %p152 = scmp.ne.s32.totalorder %s144, %s147
      %p153 = scmp.eq.s32.totalorder %s17, 0
      %p154 = por %p152, %p153
      %p155 = scmp.ne.s32.totalorder %s144, %s147
      %p156 = scmp.eq.s32.totalorder %s22, 7
      %p157 = por %p155, %p156
      %p158 = scmp.ne.s32.totalorder %s147, %s148
      %p159 = scmp.eq.s32.totalorder %s22, 0
      %p160 = por %p158, %p159
      %p161 = scmp.ne.s32.totalorder %s147, %s148
      %p162 = scmp.eq.s32.totalorder %s23, 7
      %p163 = por %p161, %p162
      %p165 = scmp.ne.s32.totalorder %s148, %s164
      %p166 = scmp.eq.s32.totalorder %s23, 0
      %p167 = por %p165, %p166
      %p168 = scmp.le.s32.totalorder 1, %s17
      %p169 = scmp.lt.s32.totalorder %s17, 9
      %p170 = pnand %p168, %p169
      %p171 = pneg %p170
      // Predicated region
      $region9: #{tpu_custom_call.1} parent=5 // pred_check
        _
      $region10: #{tpu_custom_call.1} parent=5 // pred_check_branch
        %173 = sbr.rel (%p170) target = $region12
      $region11: #{tpu_custom_call.1} parent=5 // pred_region
        %s174 = ssub.s32 %s17, 1
        // Predicated region
        $region13: #{tpu_custom_call.1} parent=11 // pred_check
          %p175 = pneg %p104
        $region14: #{tpu_custom_call.1} parent=11 // pred_check_branch
          %177 = sbr.rel (%p175) target = $region16
        $region15: #{tpu_custom_call.1} parent=11 // pred_region
          _
        $region16: #{tpu_custom_call.1} parent=11 // pred_fallthru
          _
      $region12: #{tpu_custom_call.1} parent=5 // pred_fallthru
        _
      %p178 = scmp.lt.s32.totalorder %s17, 8
      // Predicated region
      $region17: #{tpu_custom_call.1} parent=5 // pred_check
        %p179 = pneg %p178
      $region18: #{tpu_custom_call.1} parent=5 // pred_check_branch
        %181 = sbr.rel (%p179) target = $region20
      $region19: #{tpu_custom_call.1} parent=5 // pred_region
        // Predicated region
        $region21: #{tpu_custom_call.1} parent=19 // pred_check
          %p182 = pneg %p51
        $region22: #{tpu_custom_call.1} parent=19 // pred_check_branch
          %184 = sbr.rel (%p182) target = $region24
        $region23: #{tpu_custom_call.1} parent=19 // pred_region
          %s185 = sand.u32 %s41, 1
          %s186 = sand.u32 %s41, 1
          %s187 = smul.addr %s186, 24
          %s188 = scalar_lea.vmem [#allocation2], %s187
          %s189 = smul.u32 2, %s25
          %s190 = smul.addr %s24, 12
          %s191 = sadd.s32 %s189, %s190
          %s192 = smul.addr %s191, 4
          %s193 = scalar_lea.vmem %s0, %s192
          // Predicated region
          $region25: #{tpu_custom_call.1} parent=23 // pred_check
            _
          $region26: #{tpu_custom_call.1} parent=23 // pred_check_branch
            %195 = sbr.rel (0) target = $region28
          $region27: #{tpu_custom_call.1} parent=23 // pred_region
            // Predicated region
            $region29: #{tpu_custom_call.1} parent=27 // pred_check
              _
            $region30: #{tpu_custom_call.1} parent=27 // pred_check_branch
              %197 = sbr.rel (0) target = $region32
            $region31: #{tpu_custom_call.1} parent=27 // pred_region
              // Predicated region
              $region44: #{tpu_custom_call.1} parent=31 // pred_check
                _
              $region45: #{tpu_custom_call.1} parent=31 // pred_check_branch
                %217 = sbr.rel (0) target = $region47
              $region46: #{tpu_custom_call.1} parent=31 // pred_region
                loop: start=0, step=1, limit=1
                $region48: #{tpu_custom_call.1} parent=46 // loop_pre_header
                  _
                $region49: #{tpu_custom_call.1} parent=46 // loop_header
                  %s219 = sphi 0, %s223
                  %p220 = scmp.ge.s32.totalorder %s219, 1
                  %s224 = sphi %s193, %s193
                  %s225 = sphi %s188, %s188
                $region50: #{tpu_custom_call.1} parent=46 // loop_header_branch
                  %222 = sbr.rel (%p220) target = $region54
                $region51: #{tpu_custom_call.1} parent=46 // loop_body
                  %v226 = vld [vmem:[%s224] sm:$0xff]
                  %227 = vst [vmem:[%s225] sm:$0xff] %v226
                  %v228 = vld [vmem:[%s224 + $0x10] sm:$0xff]
                  %229 = vst [vmem:[%s225 + $0x8] sm:$0xff] %v228
                  %v230 = vld [vmem:[%s224 + $0x20] sm:$0xff]
                  %231 = vst [vmem:[%s225 + $0x10] sm:$0xff] %v230
                $region52: #{tpu_custom_call.1} parent=46 // loop_footer
                  %s223 = sadd.s32 1, %s219
                $region53: #{tpu_custom_call.1} parent=46 // loop_footer_branch
                  %218 = sbr.rel target = $region49
                $region54: #{tpu_custom_call.1} parent=46 // loop_exit
                  _
              $region47: #{tpu_custom_call.1} parent=31 // pred_fallthru
                _
              // Predicated region
              $region55: #{tpu_custom_call.1} parent=31 // pred_check
                _
              $region56: #{tpu_custom_call.1} parent=31 // pred_check_branch
                %233 = sbr.rel target = $region58
              $region57: #{tpu_custom_call.1} parent=31 // pred_region
                _
              $region58: #{tpu_custom_call.1} parent=31 // pred_fallthru
                _
            $region32: #{tpu_custom_call.1} parent=27 // pred_fallthru
              _
            // Predicated region
            $region33: #{tpu_custom_call.1} parent=27 // pred_check
              _
            $region34: #{tpu_custom_call.1} parent=27 // pred_check_branch
              %199 = sbr.rel target = $region36
            $region35: #{tpu_custom_call.1} parent=27 // pred_region
              %s201 = ssub.s32 256, 1
              loop: start=0, step=1, limit=1
              $region37: #{tpu_custom_call.1} parent=35 // loop_pre_header
                _
              $region38: #{tpu_custom_call.1} parent=35 // loop_header
                %s203 = sphi 0, %s207
                %p204 = scmp.ge.s32.totalorder %s203, 1
                %s208 = sphi %s193, %s193
                %s209 = sphi %s188, %s188
              $region39: #{tpu_custom_call.1} parent=35 // loop_header_branch
                %206 = sbr.rel (%p204) target = $region43
              $region40: #{tpu_custom_call.1} parent=35 // loop_body
                %v210 = vld [vmem:[%s208] sm:%s201]
                %211 = vst [vmem:[%s209] sm:%s201] %v210
                %v212 = vld [vmem:[%s208 + $0x10] sm:%s201]
                %213 = vst [vmem:[%s209 + $0x8] sm:%s201] %v212
                %v214 = vld [vmem:[%s208 + $0x20] sm:%s201]
                %215 = vst [vmem:[%s209 + $0x10] sm:%s201] %v214
              $region41: #{tpu_custom_call.1} parent=35 // loop_footer
                %s207 = sadd.s32 1, %s203
              $region42: #{tpu_custom_call.1} parent=35 // loop_footer_branch
                %202 = sbr.rel target = $region38
              $region43: #{tpu_custom_call.1} parent=35 // loop_exit
                _
            $region36: #{tpu_custom_call.1} parent=27 // pred_fallthru
              _
          $region28: #{tpu_custom_call.1} parent=23 // pred_fallthru
            _
          %234 = vnop
        $region24: #{tpu_custom_call.1} parent=19 // pred_fallthru
          _
        // Predicated region
        $region59: #{tpu_custom_call.1} parent=19 // pred_check
          %p235 = pneg %p77
        $region60: #{tpu_custom_call.1} parent=19 // pred_check_branch
          %237 = sbr.rel (%p235) target = $region62
        $region61: #{tpu_custom_call.1} parent=19 // pred_region
          %p238 = scmp.lt.s32.totalorder %s24, 3
          %s239 = scalar_select %p238, %s24, 3
          %s240 = smul.addr %s239, 2
          %s241 = smul.addr %s240, 4
          %s242 = scalar_lea.vmem %s1, %s241
        $region62: #{tpu_custom_call.1} parent=19 // pred_fallthru
          _
      $region20: #{tpu_custom_call.1} parent=5 // pred_fallthru
        _
      %p243 = scmp.le.s32.totalorder 1, %s17
      %p244 = scmp.lt.s32.totalorder %s17, 9
      %p245 = pnand %p243, %p244
      %p246 = pneg %p245
      // Predicated region
      $region63: #{tpu_custom_call.1} parent=5 // pred_check
        _
      $region64: #{tpu_custom_call.1} parent=5 // pred_check_branch
        %248 = sbr.rel (%p245) target = $region66
      $region65: #{tpu_custom_call.1} parent=5 // pred_region
        %s249 = ssub.s32 %s17, 1
        %s250 = sand.u32 %s44, 1
        %s251 = sand.u32 %s44, 1
        %s252 = smul.addr %s251, 24
        %s253 = scalar_lea.vmem [#allocation2], %s252
        // Predicated region
        $region67: #{tpu_custom_call.1} parent=65 // pred_check
          %p254 = pneg %p57
        $region68: #{tpu_custom_call.1} parent=65 // pred_check_branch
          %256 = sbr.rel (%p254) target = $region70
        $region69: #{tpu_custom_call.1} parent=65 // pred_region
          _
        $region70: #{tpu_custom_call.1} parent=65 // pred_fallthru
          _
        %s257 = sand.u32 %s44, 1
        %s258 = sand.u32 %s44, 1
        %s259 = smul.addr %s258, 24
        %s260 = scalar_lea.vmem [#allocation2], %s259
        %p261 = pneg %p57
        %p262 = pneg %p54
        %p263 = scmp.lt.s32.totalorder %s26, 3
        %s264 = scalar_select %p263, %s26, 3
        %s265 = smul.addr %s264, 2
        %s266 = smul.addr %s265, 4
        %s267 = scalar_lea.vmem %s1, %s266
        %p268 = pneg %p83
        %p269 = pneg %p80
        %p270 = pneg %p104
        %p271 = pneg %p101
        %p272 = pneg %p132
        %p273 = pneg %p129
        %s274 = sand.u32 %s119, 1
        %s275 = scalar_lea.sflag [#allocation4], %s274
        %s276 = sand.u32 %s119, 1
        %s277 = smul.addr %s276, 16
        %s278 = scalar_lea.vmem [#allocation3], %s277
        %p279 = pneg %p160
        %p280 = pneg %p157
        %s281 = sand.u32 %s147, 1
        %s282 = scalar_lea.sflag [#allocation6], %s281
        %s283 = sand.u32 %s147, 1
        %s284 = smul.addr %s283, 2
        %s285 = scalar_lea.vmem [#allocation5], %s284
        %s286 = smul.u32 2, %s27
        %p287 = scmp.lt.s32.totalorder %s26, 3
        %s288 = scalar_select %p287, %s26, 3
        %s289 = smul.addr %s288, 2
        %s290 = smul.addr %s289, 4
        %s291 = scalar_lea.vmem %s1, %s290
        %s292 = smul.u32 2, %s27
        %s293 = smul.u32 2, %s27
        %v295 = vld [vmem:[%s291] sm:$0xf]
        %v296 = vld [vmem:[%s291 + $0x4] sm:$0x1]
        %v297 = vld [vmem:[%s253] sm:$0xff]
        %v298 = vld [vmem:[%s253 + $0x8] sm:$0xff]
        %v299 = vld [vmem:[%s253 + $0x10] sm:$0x33]
        %v302 = vunpack.c.l.b16 %v295
        %v303 = vunpack.c.l.b16 %v296
        %v304 = vpack.c.b16 %v303, %v302
        %v308 = vunpack.c.l.b16 %v297
        %v309 = vunpack.c.h.b16 %v297
        %v310 = vunpack.c.l.b16 %v298
        %v311 = vunpack.c.h.b16 %v298
        %v312 = vunpack.c.l.b16 %v299
        %v313 = vunpack.c.h.b16 %v299
        %v314 = vpack.c.b16 %v310, %v308
        %v315 = vpack.c.b16 %v311, %v309
        %v316 = vpack.c.b16 %v312, %v312
        %v317 = vpack.c.b16 %v313, %v313
        %vm320 = vcmask 162816
        %v322 = vsel %vm320, %v304, 0
        %vm324 = vcmask 1041408
        %v326 = vsel %vm324, %v316, 0
        %v329 = vsel %vm324, %v317, 0
        %331 = vmatprep.subr.bf16.mxu0 0
        %332 = vmatpush1.bf16.msra.mxu0 0
        %333 = vmatprep.subr.bf16.mxu0 0
        %334 = vmatpush1.bf16.msra.mxu0 0
        %335 = vmatprep.subr.bf16.mxu0 0
        %336 = vmatpush1.bf16.msra.mxu0 0
        %337 = vmatprep.subr.bf16.mxu0 0
        %338 = vmatpush1.bf16.msra.mxu0 0
        %339 = vmatprep.subr.bf16.mxu0 0
        %340 = vmatpush1.bf16.msra.mxu0 0
        %341 = vmatprep.subr.bf16.mxu0 0
        %342 = vmatpush1.bf16.msra.mxu0 0
        %343 = vmatprep.subr.bf16.mxu0 %v329
        %344 = vmatpush1.bf16.msra.mxu0 %v326
        %345 = vmatprep.subr.bf16.mxu0 %v315
        %346 = vmatpush1.bf16.msra.mxu0 %v314
        %347 = vmatprep.subr.bf16.mxu0 0
        %348 = vmatpush2.bf16.msra.mxu0 0
        %349 = vmatprep.subr.bf16.mxu0 0
        %350 = vmatpush2.bf16.msra.mxu0 0
        %351 = vmatprep.subr.bf16.mxu0 0
        %352 = vmatpush2.bf16.msra.mxu0 0
        %353 = vmatprep.subr.bf16.mxu0 0
        %354 = vmatpush2.bf16.msra.mxu0 0
        %355 = vmatprep.subr.bf16.mxu0 0
        %356 = vmatpush2.bf16.msra.mxu0 0
        %357 = vmatprep.subr.bf16.mxu0 0
        %358 = vmatpush2.bf16.msra.mxu0 0
        %359 = vmatprep.subr.bf16.mxu0 0
        %360 = vmatpush2.bf16.msra.mxu0 0
        %361 = vmatprep.subr.bf16.mxu0 0
        %362 = vmatpush2.bf16.msra.mxu0 0
        %363 = vmatprep.mubr.bf16.mxu0 0
        %364 = vmatmul.mubr.bf16.gmra.mxu0 %v322
        %v365 = vpop.f32.mrf.mxu0
        %v366 = vadd.f32 0.0, %v365
        %v367 = vpop.f32.mrf.mxu0
        %v368 = vadd.f32 0.0, %v367
        %v369 = vpop.f32.mrf.mxu0
        %v370 = vadd.f32 0.0, %v369
        %v371 = vpop.f32.mrf.mxu0
        %v372 = vadd.f32 0.0, %v371
        %373 = vdwg.mxu0
        %vm374 = vcmp.eq.f32.partialorder %v370, 0.0
        %vm375 = vcmp.eq.f32.partialorder %v372, 0.0
        %v376 = vsel %vm374, 1.0, %v370
        %v377 = vsel %vm375, 1.0, %v372
        %v378 = vrcp.pop %v376
        %v379 = vrcp.pop %v377
        %v380 = vld [vmem:[%s2] sm:$0xff]
        %v381 = vlaneseq
        %v382 = vshrl.u32 %v381, 7
        %v383 = vsub.s32 0, %v382
        %v384 = vrot.slane %v378, %v383
        %v385 = vlaneseq
        %v386 = vshrl.u32 %v385, 7
        %v387 = vsub.s32 0, %v386
        %v388 = vrot.slane %v379, %v387
        %v389 = vmul.f32 %v366, %v384
        %v390 = vmul.f32 %v368, %v388
        %392 = vset.pattern.permute.xlu0 0
        %393 = vperm.xlu0 %392, %v380
        %v394 = vpop.permute.xlu0 %393
        %v396 = vadd.f32 %v389, %v394
        %v397 = vadd.f32 %v390, %v394
        %v398 = vsel %vm374, 1, 0
        %v399 = vsel %vm375, 1, 0
        %v400 = vlaneseq
        %v401 = vshrl.u32 %v400, 7
        %v402 = vsub.s32 0, %v401
        %v403 = vrot.slane %v398, %v402
        %v404 = vlaneseq
        %v405 = vshrl.u32 %v404, 7
        %v406 = vsub.s32 0, %v405
        %v407 = vrot.slane %v399, %v406
        %vm408 = vcmp.eq.s32.totalorder %v403, 1
        %vm409 = vcmp.eq.s32.totalorder %v407, 1
        %v410 = vsel %vm408, 0.0, %v396
        %v411 = vsel %vm409, 0.0, %v397
        %412 = vset.pattern.permute.xlu0 1
        %413 = vperm.xlu0 %412, %v380
        %v414 = vpop.permute.xlu0 %413
        %v416 = vmul.f32 %v410, %v414
        %v417 = vmul.f32 %v411, %v414
        %418 = vset.pattern.permute.xlu0 2
        %419 = vperm.xlu0 %418, %v380
        %v420 = vpop.permute.xlu0 %419
        %v422 = vadd.f32 %v416, %v420
        %v423 = vadd.f32 %v417, %v420
        %v424 = vmax.f32 %v422, 0.0
        %v425 = vmax.f32 %v423, 0.0
        %426 = vst [vmem:[%s278] sm:$0xff] %v424
        %427 = vst [vmem:[%s278 + $0x8] sm:$0xff] %v425
        %v428 = vsel %vm374, 0.0, 1.0
        %v429 = vsel %vm375, 0.0, 1.0
        %v432 = vcombine.low %v428, %v429
        %v434 = vunpack.c.l.s4 1966171168
        %v435 = vunpack.c.0.s8 %v434
        %v436 = vlaneseq
        %v437 = vshrl.u32 %v436, 7
        %v438 = vsub.s32 %v435, %v437
        %v439 = vrot.slane %v432, %v438
        %v441 = vunpack.c.l.s4 1966171168
        %v442 = vunpack.c.0.s8 %v441
        %v443 = vlaneseq
        %v444 = vshrl.u32 %v443, 7
        %v445 = vsub.s32 %v442, %v444
        %v446 = vrot.slane %v439, %v445
        %v448 = vlaneseq
        %vm449 = vcmp.ge.s32.totalorder %v448, 0
        %vm450 = vcmp.lt.s32.totalorder %v448, 256
        %vm451 = vmand %vm449, %vm450
        %452 = vst.msk [vmem:[%s285] sm:$0x3] %vm451, %v446
        %s453 = sand.u32 %s119, 1
        %s454 = scalar_lea.sflag [#allocation4], %s453
        %s455 = sand.u32 %s119, 1
        %s456 = smul.addr %s455, 16
        %s457 = scalar_lea.vmem [#allocation3], %s456
        %s458 = sand.u32 %s147, 1
        %s459 = scalar_lea.sflag [#allocation6], %s458
        %s460 = sand.u32 %s147, 1
        %s461 = smul.addr %s460, 2
        %s462 = scalar_lea.vmem [#allocation5], %s461
        // Predicated region
        $region71: #{tpu_custom_call.1} parent=65 // pred_check
          %p463 = pneg %p129
        $region72: #{tpu_custom_call.1} parent=65 // pred_check_branch
          %465 = sbr.rel (%p463) target = $region74
        $region73: #{tpu_custom_call.1} parent=65 // pred_region
          %s466 = smul.u32 2, %s27
          %s468 = ssub.s32 256, 256
          %469 = vsyncadd %s454, %s468
          %s470 = smul.addr %s26, 4
          %s471 = sadd.s32 %s466, %s470
          %s472 = smul.addr %s471, 128
          %s473 = scalar_lea.hbm %s3, %s472
          %s475 = sshll.u32 %s457, 4
          %s476 = int_to_ptr.vmem [resolvable:$true] %s475
          %478 = dma.vmem_to_hbm [thread:$0]  %s476, 256, %s473, %s454
        $region74: #{tpu_custom_call.1} parent=65 // pred_fallthru
          _
        // Predicated region
        $region75: #{tpu_custom_call.1} parent=65 // pred_check
          %p479 = pneg %p157
        $region76: #{tpu_custom_call.1} parent=65 // pred_check_branch
          %481 = sbr.rel (%p479) target = $region78
        $region77: #{tpu_custom_call.1} parent=65 // pred_region
          %s482 = smul.u32 2, %s27
          %s484 = ssub.s32 32, 32
          %485 = vsyncadd %s459, %s484
          %s486 = smul.addr %s26, 4
          %s487 = sadd.s32 %s482, %s486
          %s488 = smul.addr %s487, 16
          %s489 = scalar_lea.hbm %s4, %s488
          %s491 = sshll.u32 %s462, 4
          %s492 = int_to_ptr.vmem [resolvable:$true] %s491
          %494 = dma.vmem_to_hbm [thread:$0]  %s492, 32, %s489, %s459
        $region78: #{tpu_custom_call.1} parent=65 // pred_fallthru
          _
      $region66: #{tpu_custom_call.1} parent=5 // pred_fallthru
        _
      %p495 = scmp.le.s32.totalorder 2, %s17
      // Predicated region
      $region79: #{tpu_custom_call.1} parent=5 // pred_check
        %p496 = pneg %p495
      $region80: #{tpu_custom_call.1} parent=5 // pred_check_branch
        %498 = sbr.rel (%p496) target = $region82
      $region81: #{tpu_custom_call.1} parent=5 // pred_region
        %s499 = ssub.s32 %s17, 2
        // Predicated region
        $region83: #{tpu_custom_call.1} parent=81 // pred_check
          %p500 = pneg %p135
        $region84: #{tpu_custom_call.1} parent=81 // pred_check_branch
          %502 = sbr.rel (%p500) target = $region86
        $region85: #{tpu_custom_call.1} parent=81 // pred_region
          %s503 = sand.u32 %s120, 1
          %s504 = scalar_lea.sflag [#allocation4], %s503
          %s505 = sand.u32 %s120, 1
          %s506 = smul.addr %s505, 16
          %s507 = scalar_lea.vmem [#allocation3], %s506
          %508 = dma.done %s504, 256
        $region86: #{tpu_custom_call.1} parent=81 // pred_fallthru
          _
        // Predicated region
        $region87: #{tpu_custom_call.1} parent=81 // pred_check
          %p509 = pneg %p163
        $region88: #{tpu_custom_call.1} parent=81 // pred_check_branch
          %511 = sbr.rel (%p509) target = $region90
        $region89: #{tpu_custom_call.1} parent=81 // pred_region
          %s512 = sand.u32 %s148, 1
          %s513 = scalar_lea.sflag [#allocation6], %s512
          %s514 = sand.u32 %s148, 1
          %s515 = smul.addr %s514, 2
          %s516 = scalar_lea.vmem [#allocation5], %s515
          %517 = dma.done %s513, 32
        $region90: #{tpu_custom_call.1} parent=81 // pred_fallthru
          _
      $region82: #{tpu_custom_call.1} parent=5 // pred_fallthru
        _
    $region6: #{tpu_custom_call.1} parent=1 // loop_footer
      %s21 = sadd.s32 1, %s17
    $region7: #{tpu_custom_call.1} parent=1 // loop_footer_branch
      %16 = sbr.rel target = $region3
    $region8: #{tpu_custom_call.1} parent=1 // loop_exit
      _
    %518 = vsyncpa [#allocation4], 1
    %s519 = scalar_lea.sflag [#allocation4], 1
    %520 = vsyncpa %s519, 1
    %521 = vsyncpa [#allocation6], 1
    %s522 = scalar_lea.sflag [#allocation6], 1
    %523 = vsyncpa %s522, 1

</llo_original>
